<compile_context>
chip_gen: v6e
topology: v6e:2x2x1
jax: 0.10.0
libtpu: 0.0.40
codegen_flags: <defaults>
</compile_context>

<pallas_src>
import jax
import jax.numpy as jnp
from jax import lax
from jax.experimental import pallas as pl
from jax.experimental.pallas import tpu as pltpu

_LANE = 128


def _pad_way(way: int) -> int:
    return pl.cdiv(way, _LANE) * _LANE


# ---------------------------------------------------------------------------
# Single-task forward: one full-array block, no grid.
# ---------------------------------------------------------------------------
def _linear_kernel(x_ref, w_ref, b_ref, o_ref):
    # x: [N, D], w: [WAY_P, D] (lane-padded), b: [1, WAY_P] -> o: [N, WAY_P]
    acc = lax.dot_general(
        x_ref[...], w_ref[...],
        dimension_numbers=(((1,), (1,)), ((), ())),   # contract last dims; no .T
        preferred_element_type=jnp.float32,
    )
    o_ref[...] = (acc + b_ref[...]).astype(o_ref.dtype)


def base_learner_forward(input_x, fc1_w, fc1_b):
    """Pallas implementation of BaseLearner.forward (F.linear)."""
    n, d = input_x.shape
    way, d_w = fc1_w.shape
    assert d == d_w and fc1_b.shape == (way,)

    way_p = _pad_way(way)
    # Zero-pad the class axis so the kernel output is lane-dense.
    w_p = jnp.zeros((way_p, d), fc1_w.dtype).at[:way, :].set(fc1_w)
    b_p = jnp.zeros((1, way_p), fc1_b.dtype).at[0, :way].set(fc1_b)

    out_dtype = input_x.dtype  # match F.linear: output dtype follows inputs
    itemsize = jnp.dtype(out_dtype).itemsize
    cost = pl.CostEstimate(
        flops=2 * n * d * way_p,
        transcendentals=0,
        bytes_accessed=(input_x.size + w_p.size + b_p.size + n * way_p) * itemsize,
    )

    out_p = pl.pallas_call(
        _linear_kernel,
        out_shape=jax.ShapeDtypeStruct((n, way_p), out_dtype),
        in_specs=[
            pl.BlockSpec(memory_space=pltpu.MemorySpace.VMEM),
            pl.BlockSpec(memory_space=pltpu.MemorySpace.VMEM),
            pl.BlockSpec(memory_space=pltpu.MemorySpace.VMEM),
        ],
        out_specs=pl.BlockSpec(memory_space=pltpu.MemorySpace.VMEM),
        cost_estimate=cost,
    )(input_x, w_p, b_p)
    return out_p[:, :way]


# ---------------------------------------------------------------------------
# Batched-over-tasks forward: one pallas_call for T inner-loop instances.
# grid=(T,) marked "parallel" -> sharded across TensorCores on v7x megacore.
# ---------------------------------------------------------------------------
def _linear_kernel_batched(x_ref, w_ref, b_ref, o_ref):
    # Per-task block: x [1,N,D], w [1,WAY_P,D], b [1,1,WAY_P] -> o [1,N,WAY_P]
    acc = lax.dot_general(
        x_ref[0], w_ref[0],
        dimension_numbers=(((1,), (1,)), ((), ())),
        preferred_element_type=jnp.float32,
    )
    o_ref[0] = (acc + b_ref[0]).astype(o_ref.dtype)


def base_learner_forward_batched(input_x, fc1_w, fc1_b):
    """Forward for a stack of T tasks: x [T,N,D], w [T,way,D], b [T,way]."""
    t, n, d = input_x.shape
    t_w, way, d_w = fc1_w.shape
    assert t == t_w and d == d_w and fc1_b.shape == (t, way)

    way_p = _pad_way(way)
    w_p = jnp.zeros((t, way_p, d), fc1_w.dtype).at[:, :way, :].set(fc1_w)
    b_p = jnp.zeros((t, 1, way_p), fc1_b.dtype).at[:, 0, :way].set(fc1_b)

    out_dtype = input_x.dtype
    itemsize = jnp.dtype(out_dtype).itemsize
    cost = pl.CostEstimate(
        flops=2 * t * n * d * way_p,
        transcendentals=0,
        bytes_accessed=(input_x.size + w_p.size + b_p.size + t * n * way_p) * itemsize,
    )

    out_p = pl.pallas_call(
        _linear_kernel_batched,
        out_shape=jax.ShapeDtypeStruct((t, n, way_p), out_dtype),
        grid=(t,),
        in_specs=[
            pl.BlockSpec((1, n, d), lambda i: (i, 0, 0)),
            pl.BlockSpec((1, way_p, d), lambda i: (i, 0, 0)),
            pl.BlockSpec((1, 1, way_p), lambda i: (i, 0, 0)),
        ],
        out_specs=pl.BlockSpec((1, n, way_p), lambda i: (i, 0, 0)),
        compiler_params=pltpu.CompilerParams(
            dimension_semantics=("parallel",)),
        cost_estimate=cost,
    )(input_x, w_p, b_p)
    return out_p[:, :, :way]


# ---------------------------------------------------------------------------
# Parameter init mirroring BaseLearner.__init__.
# ---------------------------------------------------------------------------
def init_base_learner_params(key, way, z_dim):
    """fc1_w: kaiming_normal_ (fan_in, gain=sqrt(2)) -> std = sqrt(2/z_dim); fc1_b: zeros."""
    std = (2.0 / z_dim) ** 0.5
    fc1_w = jax.random.normal(key, (way, z_dim), dtype=jnp.float32) * std
    fc1_b = jnp.zeros((way,), dtype=jnp.float32)
    return fc1_w, fc1_b


# TODO(synk): the full MTL inner loop (forward + grad + `update_step` SGD steps with
# weights resident in VMEM scratch) lives outside this module's forward; only the
# linear head itself is implemented here.

if __name__ == "__main__":
    # Small shapes consistent with the module: way=5, N = way*shot = 25, z_dim = 32.
    way, shot, z_dim = 5, 5, 32
    n = way * shot

    key = jax.random.PRNGKey(0)
    k_x, k_w, k_bx, k_bw, k_bb = jax.random.split(key, 5)

    # --- single-task forward (exact module semantics) ---
    input_x = jax.random.normal(k_x, (n, z_dim), dtype=jnp.float32)
    fc1_w, fc1_b = init_base_learner_params(k_w, way, z_dim)

    out = jax.block_until_ready(base_learner_forward(input_x, fc1_w, fc1_b))
    ref = input_x @ fc1_w.T + fc1_b[None, :]
    assert out.shape == (n, way)
    assert jnp.allclose(out, ref, atol=1e-5, rtol=1e-5)

    # --- batched-over-tasks forward (amortizes launch overhead; megacore-parallel) ---
    T = 4
    xb = jax.random.normal(k_bx, (T, n, z_dim), dtype=jnp.float32)
    wb = jax.random.normal(k_bw, (T, way, z_dim), dtype=jnp.float32) * (2.0 / z_dim) ** 0.5
    bb = 0.1 * jax.random.normal(k_bb, (T, way), dtype=jnp.float32)

    outb = jax.block_until_ready(base_learner_forward_batched(xb, wb, bb))
    refb = jnp.einsum("tnd,twd->tnw", xb, wb) + bb[:, None, :]
    assert outb.shape == (T, n, way)
    assert jnp.allclose(outb, refb, atol=1e-5, rtol=1e-5)

    print("KERNEL_OK")
</pallas_src>

<mosaic_0001>
module attributes {stable_mosaic.version = 11 : i64} {
  func.func @_linear_kernel(%arg0: memref<25x32xf32, #tpu.memory_space<vmem>>, %arg1: memref<128x32xf32, #tpu.memory_space<vmem>>, %arg2: memref<1x128xf32, #tpu.memory_space<vmem>>, %arg3: memref<25x128xf32, #tpu.memory_space<vmem>>) attributes {dimension_semantics = [], scalar_prefetch = 0 : i64, scratch_operands = 0 : i64, tpu.core_type = #tpu.core_type<tc>} {
    %c0 = arith.constant 0 : index
    %c0_0 = arith.constant 0 : index
    %0 = vector.load %arg0[%c0, %c0_0] : memref<25x32xf32, #tpu.memory_space<vmem>>, vector<25x32xf32>
    %c0_1 = arith.constant 0 : index
    %c0_2 = arith.constant 0 : index
    %1 = vector.load %arg1[%c0_1, %c0_2] : memref<128x32xf32, #tpu.memory_space<vmem>>, vector<128x32xf32>
    %cst = arith.constant dense<0.000000e+00> : vector<25x128xf32>
    %2 = tpu.matmul %0, %1, %cst {dimension_numbers = #tpu.dot_dimension_numbers<[1], [1], [0], [0], [0, 0, 1, 0], [], []>} : vector<25x32xf32>, vector<128x32xf32>, vector<25x128xf32> -> vector<25x128xf32>
    %c0_3 = arith.constant 0 : index
    %c0_4 = arith.constant 0 : index
    %3 = vector.load %arg2[%c0_3, %c0_4] : memref<1x128xf32, #tpu.memory_space<vmem>>, vector<1x128xf32>
    %4 = vector.broadcast %3 : vector<1x128xf32> to vector<25x128xf32>
    %5 = arith.addf %2, %4 : vector<25x128xf32>
    %c0_5 = arith.constant 0 : index
    %c0_6 = arith.constant 0 : index
    %6 = vector.load %arg3[%c0_5, %c0_6] : memref<25x128xf32, #tpu.memory_space<vmem>>, vector<25x128xf32>
    tpu.vector_store %arg3[%c0_5, %c0_6], %5 {strides = array<i32>} : memref<25x128xf32, #tpu.memory_space<vmem>>, vector<25x128xf32>,
    return
  }
}

</mosaic_0001>

<llo_original>
// kernel: tpu_custom_call.1
$region0: #{tpu_custom_call.1}
  #allocation0 [shape = 'u32[]', space=smem, size = 0x4, offset = 0x4, fixed_abs, tag = 'smem constant byte address 0x4 - core index']
  #allocation1 [shape = 'u32[144,128]{1,0:T(1,128)}', space=vmem, size = 0x12000, scoped, tag = 'internal scratch']
  %s0 = inlined_call_operand.vmem [shape: f32[25,32], index: 0, kind: input, shape index: {}]
  %s1 = inlined_call_operand.vmem [shape: f32[128,32], index: 1, kind: input, shape index: {}]
  %s2 = inlined_call_operand.vmem [shape: f32[1,128], index: 2, kind: input, shape index: {}]
  %s3 = inlined_call_operand.hbm [shape: f32[25,128], index: 3, kind: output, shape index: {}]
  %s4 = sld [smem:[#allocation0]]
  $region22: #{tpu_custom_call.1} parent=0
    _
  %s6 = ssub.s32 1, %s4
  %s7 = scalar_select 0, %s6, %s4
  $region1: #{tpu_custom_call.1} parent=0
    #allocation2 [shape = 'u8[16384]{0}', space=vmem, size = 0x4000, scoped, tag = 'output window, operand 0, single buffered']
    #allocation3 [shape = 's32[1]{0}', space=sflag, size = 0x4, scoped, tag = 'scoped memory for tpu_custom_call.1']
    %8 = vsyncpa [#allocation3], 0
    // Predicated region
    $region2: #{tpu_custom_call.1} parent=1 // pred_check
      _
    $region3: #{tpu_custom_call.1} parent=1 // pred_check_branch
      %10 = sbr.rel (0) target = $region5
    $region4: #{tpu_custom_call.1} parent=1 // pred_region
      _
    $region5: #{tpu_custom_call.1} parent=1 // pred_fallthru
      _
    // Predicated region
    $region6: #{tpu_custom_call.1} parent=1 // pred_check
      _
    $region7: #{tpu_custom_call.1} parent=1 // pred_check_branch
      %12 = sbr.rel (0) target = $region9
    $region8: #{tpu_custom_call.1} parent=1 // pred_region
      _
    $region9: #{tpu_custom_call.1} parent=1 // pred_fallthru
      _
    // Predicated region
    $region10: #{tpu_custom_call.1} parent=1 // pred_check
      _
    $region11: #{tpu_custom_call.1} parent=1 // pred_check_branch
      %14 = sbr.rel (0) target = $region13
    $region12: #{tpu_custom_call.1} parent=1 // pred_region
      _
    $region13: #{tpu_custom_call.1} parent=1 // pred_fallthru
      _
    %v15 = vld [vmem:[%s0] sm:$0xff]
    %v16 = vld [vmem:[%s0 + $0x8] sm:$0xff]
    %v17 = vld [vmem:[%s0 + $0x10] sm:$0xff]
    %v18 = vld [vmem:[%s0 + $0x18] sm:$0x1]
    %v19 = vld [vmem:[%s1] sm:$0xff]
    %v20 = vld [vmem:[%s1 + $0x8] sm:$0xff]
    %v21 = vld [vmem:[%s1 + $0x10] sm:$0xff]
    %v22 = vld [vmem:[%s1 + $0x18] sm:$0xff]
    %v23 = vld [vmem:[%s1 + $0x20] sm:$0xff]
    %v24 = vld [vmem:[%s1 + $0x28] sm:$0xff]
    %v25 = vld [vmem:[%s1 + $0x30] sm:$0xff]
    %v26 = vld [vmem:[%s1 + $0x38] sm:$0xff]
    %v27 = vld [vmem:[%s1 + $0x40] sm:$0xff]
    %v28 = vld [vmem:[%s1 + $0x48] sm:$0xff]
    %v29 = vld [vmem:[%s1 + $0x50] sm:$0xff]
    %v30 = vld [vmem:[%s1 + $0x58] sm:$0xff]
    %v31 = vld [vmem:[%s1 + $0x60] sm:$0xff]
    %v32 = vld [vmem:[%s1 + $0x68] sm:$0xff]
    %v33 = vld [vmem:[%s1 + $0x70] sm:$0xff]
    %v34 = vld [vmem:[%s1 + $0x78] sm:$0xff]
    %v35 = vld [vmem:[%s2] sm:$0x1]
    %v37 = vlaneseq
    %v38 = vshrl.u32 %v37, 7
    %v39 = vsub.s32 0, %v38
    %v40 = vrot.slane %v35, %v39
    %vm42 = vcmask 261120
    %v44 = vsel %vm42, %v15, 0
    %v47 = vsel %vm42, %v16, 0
    %v50 = vsel %vm42, %v17, 0
    %v53 = vsel %vm42, %v18, 0
    %v56 = vsel %vm42, %v19, 0
    %v59 = vsel %vm42, %v20, 0
    %v62 = vsel %vm42, %v21, 0
    %v65 = vsel %vm42, %v22, 0
    %v68 = vsel %vm42, %v23, 0
    %v71 = vsel %vm42, %v24, 0
    %v74 = vsel %vm42, %v25, 0
    %v77 = vsel %vm42, %v26, 0
    %v80 = vsel %vm42, %v27, 0
    %v83 = vsel %vm42, %v28, 0
    %v86 = vsel %vm42, %v29, 0
    %v89 = vsel %vm42, %v30, 0
    %v92 = vsel %vm42, %v31, 0
    %v95 = vsel %vm42, %v32, 0
    %v98 = vsel %vm42, %v33, 0
    %v101 = vsel %vm42, %v34, 0
    %103 = vmatprep.subr.mxu0 0.0
    %104 = vmatpush1.xpose.msra.mxu0 %v101
    %105 = vmatprep.subr.mxu0 0.0
    %106 = vmatpush1.xpose.msra.mxu0 %v98
    %107 = vmatprep.subr.mxu0 0.0
    %108 = vmatpush1.xpose.msra.mxu0 %v95
    %109 = vmatprep.subr.mxu0 0.0
    %110 = vmatpush1.xpose.msra.mxu0 %v92
    %111 = vmatprep.subr.mxu0 0.0
    %112 = vmatpush1.xpose.msra.mxu0 %v89
    %113 = vmatprep.subr.mxu0 0.0
    %114 = vmatpush1.xpose.msra.mxu0 %v86
    %115 = vmatprep.subr.mxu0 0.0
    %116 = vmatpush1.xpose.msra.mxu0 %v83
    %117 = vmatprep.subr.mxu0 0.0
    %118 = vmatpush1.xpose.msra.mxu0 %v80
    %119 = vmatprep.subr.mxu0 0.0
    %120 = vmatpush1.xpose.msra.mxu0 %v77
    %121 = vmatprep.subr.mxu0 0.0
    %122 = vmatpush1.xpose.msra.mxu0 %v74
    %123 = vmatprep.subr.mxu0 0.0
    %124 = vmatpush1.xpose.msra.mxu0 %v71
    %125 = vmatprep.subr.mxu0 0.0
    %126 = vmatpush1.xpose.msra.mxu0 %v68
    %127 = vmatprep.subr.mxu0 0.0
    %128 = vmatpush1.xpose.msra.mxu0 %v65
    %129 = vmatprep.subr.mxu0 0.0
    %130 = vmatpush1.xpose.msra.mxu0 %v62
    %131 = vmatprep.subr.mxu0 0.0
    %132 = vmatpush1.xpose.msra.mxu0 %v59
    %133 = vmatprep.subr.mxu0 0.0
    %134 = vmatpush1.xpose.msra.mxu0 %v56
    %135 = vmatprep.subr.mxu0 0.0
    %136 = vmatpush2.xpose.msra.mxu0 0.0
    %137 = vmatprep.subr.mxu0 0.0
    %138 = vmatpush2.xpose.msra.mxu0 0.0
    %139 = vmatprep.subr.mxu0 0.0
    %140 = vmatpush2.xpose.msra.mxu0 0.0
    %141 = vmatprep.subr.mxu0 0.0
    %142 = vmatpush2.xpose.msra.mxu0 0.0
    %143 = vmatprep.subr.mxu0 0.0
    %144 = vmatpush2.xpose.msra.mxu0 0.0
    %145 = vmatprep.subr.mxu0 0.0
    %146 = vmatpush2.xpose.msra.mxu0 0.0
    %147 = vmatprep.subr.mxu0 0.0
    %148 = vmatpush2.xpose.msra.mxu0 0.0
    %149 = vmatprep.subr.mxu0 0.0
    %150 = vmatpush2.xpose.msra.mxu0 0.0
    %151 = vmatprep.subr.mxu0 0.0
    %152 = vmatpush2.xpose.msra.mxu0 0.0
    %153 = vmatprep.subr.mxu0 0.0
    %154 = vmatpush2.xpose.msra.mxu0 0.0
    %155 = vmatprep.subr.mxu0 0.0
    %156 = vmatpush2.xpose.msra.mxu0 0.0
    %157 = vmatprep.subr.mxu0 0.0
    %158 = vmatpush2.xpose.msra.mxu0 0.0
    %159 = vmatprep.subr.mxu0 0.0
    %160 = vmatpush2.xpose.msra.mxu0 0.0
    %161 = vmatprep.subr.mxu0 0.0
    %162 = vmatpush2.xpose.msra.mxu0 0.0
    %163 = vmatprep.subr.mxu0 0.0
    %164 = vmatpush2.xpose.msra.mxu0 0.0
    %165 = vmatprep.subr.mxu0 0.0
    %166 = vmatpush2.xpose.msra.mxu0 0.0
    %167 = vmatprep.mubr.f32.mxu0 0.0
    %168 = vmatmul.mubr.f32.gmra.mxu0 %v44
    %v169 = vpop.f32.mrf.mxu0
    %v170 = vadd.f32 %v40, %v169
    %v171 = vpop.f32.mrf.mxu0
    %172 = vmatprep.mubr.f32.mxu0 0.0
    %173 = vmatmul.mubr.f32.gmra.mxu0 %v47
    %v174 = vpop.f32.mrf.mxu0
    %v175 = vadd.f32 %v40, %v174
    %v176 = vpop.f32.mrf.mxu0
    %177 = vmatprep.mubr.f32.mxu0 0.0
    %178 = vmatmul.mubr.f32.gmra.mxu0 %v50
    %v179 = vpop.f32.mrf.mxu0
    %v180 = vadd.f32 %v40, %v179
    %v181 = vpop.f32.mrf.mxu0
    %182 = vmatprep.mubr.f32.mxu0 0.0
    %183 = vmatmul.mubr.f32.gmra.mxu0 %v53
    %v184 = vpop.f32.mrf.mxu0
    %v185 = vadd.f32 %v40, %v184
    %v186 = vpop.f32.mrf.mxu0
    %187 = vdwg.mxu0
    %188 = vst [vmem:[#allocation2] sm:$0xff] %v170
    %189 = vst [vmem:[#allocation2 + $0x8] sm:$0xff] %v175
    %190 = vst [vmem:[#allocation2 + $0x10] sm:$0xff] %v180
    %191 = vst [vmem:[#allocation2 + $0x18] sm:$0x1] %v185
    // Predicated region
    $region14: #{tpu_custom_call.1} parent=1 // pred_check
      _
    $region15: #{tpu_custom_call.1} parent=1 // pred_check_branch
      %193 = sbr.rel (0) target = $region17
    $region16: #{tpu_custom_call.1} parent=1 // pred_region
      %s195 = ssub.s32 512, 512
      %196 = vsyncadd [#allocation3], %s195
      %s197 = sshll.u32 [#allocation2], 4
      %s198 = int_to_ptr.vmem [resolvable:$true] %s197
      %203 = dma.vmem_to_hbm [thread:$0]  %s198, 512, %s3, [#allocation3], 128, 128, 8
    $region17: #{tpu_custom_call.1} parent=1 // pred_fallthru
      _
    // Predicated region
    $region18: #{tpu_custom_call.1} parent=1 // pred_check
      _
    $region19: #{tpu_custom_call.1} parent=1 // pred_check_branch
      %205 = sbr.rel (0) target = $region21
    $region20: #{tpu_custom_call.1} parent=1 // pred_region
      %206 = dma.done [#allocation3], 512
    $region21: #{tpu_custom_call.1} parent=1 // pred_fallthru
      _
    %207 = vsyncpa [#allocation3], 1

</llo_original>
